<compile_context>
chip_gen: v7x
topology: tpu7x:2x2x1
jax: 0.10.0
libtpu: 0.0.40
codegen_flags: <defaults>
</compile_context>

<pallas_src>
import functools

import jax
import jax.numpy as jnp
from jax import lax
from jax.experimental import pallas as pl
from jax.experimental.pallas import tpu as pltpu


def _conv3x3_kernel(x_ref, w_ref, b_ref, o_ref, col_ref, *, H, W, Cin, cin_pad):
    """One batch element of a 3x3 same-padding conv in lane-dense layout.

    x_ref  : (1, Cin, H*W)       input, VMEM (flattened spatial on lanes)
    w_ref  : (Cout, 9*cin_pad)   zero-padded im2col weights, VMEM
    b_ref  : (Cout, 1)           bias, VMEM
    o_ref  : (1, Cout, H*W)      output, VMEM (lane-dense)
    col_ref: (9*cin_pad, H*W)    im2col scratch, VMEM
    """
    P = H * W
    x = x_ref[0]                                    # (Cin, P)

    # Padding rows of the im2col scratch must be zero (they meet zero weight
    # columns, but uninitialised VMEM could hold NaN/Inf).  Scratch persists
    # across grid steps / cores, so zero it unconditionally - it is tiny.
    col_ref[...] = jnp.zeros_like(col_ref)

    # Boundary masks on the flattened spatial index p = h*W + w.
    lane = lax.broadcasted_iota(jnp.int32, (Cin, P), 1)
    if (W & (W - 1)) == 0:                          # power-of-two fast path
        wcol = jnp.bitwise_and(lane, W - 1)
    else:
        wcol = lane % W
    top_ok = lane >= W                              # h - 1 >= 0
    bot_ok = lane < (H - 1) * W                     # h + 1 <= H - 1
    left_ok = wcol >= 1                             # w - 1 >= 0
    right_ok = wcol <= W - 2                        # w + 1 <= W - 1

    # Build the 9 shifted taps with XLU rolls + masks and drop each one into
    # an 8-sublane-aligned row block of the im2col scratch.
    t = 0
    for dy in (-1, 0, 1):
        for dx in (-1, 0, 1):
            s = dy * W + dx                         # flat-index shift of the tap
            tap = x if s == 0 else pltpu.roll(x, (-s) % P, axis=1)
            conds = []
            if dy == -1:
                conds.append(top_ok)
            elif dy == 1:
                conds.append(bot_ok)
            if dx == -1:
                conds.append(left_ok)
            elif dx == 1:
                conds.append(right_ok)
            if conds:
                m = conds[0]
                for c in conds[1:]:
                    m = m & c
                tap = jnp.where(m, tap, 0.0)
            col_ref[pl.ds(t * cin_pad, Cin), :] = tap
            t += 1

    # Single fused contraction over K = 9*cin_pad on the MXU; bias added once
    # as a broadcast (no per-tap accumulator read-modify-write).
    out = jnp.dot(w_ref[...], col_ref[...],
                  preferred_element_type=jnp.float32)        # (Cout, P)
    out = out + b_ref[...]
    o_ref[0] = out.astype(o_ref.dtype)


def grad_block_forward(x_nchw, temb, weight_oihw, bias):
    """Equivalent of GradBlock.forward(x, temb) -> (conv(x), x)."""
    del temb                                        # GradBlock ignores temb
    N, Cin, H, W = x_nchw.shape
    Cout = weight_oihw.shape[0]
    P = H * W
    cin_pad = ((Cin + 7) // 8) * 8                  # sublane-aligned tap stride

    # Free, contiguous reshape: spatial goes to the lane axis (no transpose).
    x_flat = x_nchw.reshape(N, Cin, P)

    # Tiny (Cout x 9*cin_pad) weight re-pack done once outside the kernel:
    #   w_k[cout, t*cin_pad + cin] = weight[cout, cin, kh, kw],  t = kh*3 + kw
    w9c = jnp.transpose(weight_oihw, (0, 2, 3, 1)).reshape(Cout, 9, Cin)
    w_k = jnp.pad(w9c, ((0, 0), (0, 0), (0, cin_pad - Cin))).reshape(
        Cout, 9 * cin_pad).astype(x_nchw.dtype)
    b2 = bias.reshape(Cout, 1).astype(jnp.float32)

    kernel = functools.partial(_conv3x3_kernel, H=H, W=W, Cin=Cin,
                               cin_pad=cin_pad)

    out_flat = pl.pallas_call(
        kernel,
        out_shape=jax.ShapeDtypeStruct((N, Cout, P), x_nchw.dtype),
        grid_spec=pltpu.PrefetchScalarGridSpec(
            num_scalar_prefetch=0,
            grid=(N,),
            in_specs=[
                pl.BlockSpec((1, Cin, P), lambda n: (n, 0, 0)),
                pl.BlockSpec((Cout, 9 * cin_pad), lambda n: (0, 0)),
                pl.BlockSpec((Cout, 1), lambda n: (0, 0)),
            ],
            out_specs=pl.BlockSpec((1, Cout, P), lambda n: (n, 0, 0)),
            scratch_shapes=[pltpu.VMEM((9 * cin_pad, P), jnp.float32)],
        ),
        compiler_params=pltpu.CompilerParams(
            dimension_semantics=("parallel",)),
    )(x_flat, w_k, b2)

    conv_out = out_flat.reshape(N, Cout, H, W)      # free contiguous reshape
    return conv_out, x_nchw


if __name__ == "__main__":
    # Small shapes consistent with the module: batch=2, base=4, spatial=16.
    N, BASE, H, W = 2, 4, 16, 16
    TEMB_DIM = 32

    key = jax.random.PRNGKey(0)
    kx, kt, kw, kb = jax.random.split(key, 4)

    x = jax.random.normal(kx, (N, BASE, H, W), dtype=jnp.float32)
    temb = jax.random.normal(kt, (N, TEMB_DIM), dtype=jnp.float32)

    # Deterministic parameter init (PyTorch Conv2d default: U(-1/sqrt(fan_in), +)).
    fan_in = BASE * 3 * 3
    bound = 1.0 / (fan_in ** 0.5)
    weight = jax.random.uniform(kw, (BASE, BASE, 3, 3), jnp.float32,
                                minval=-bound, maxval=bound)
    bias = jax.random.uniform(kb, (BASE,), jnp.float32,
                              minval=-bound, maxval=bound)

    conv_out, x_out = jax.jit(grad_block_forward)(x, temb, weight, bias)
    jax.block_until_ready((conv_out, x_out))

    # Sanity check against XLA's conv.
    ref = lax.conv_general_dilated(
        x, weight, window_strides=(1, 1), padding="SAME",
        dimension_numbers=("NCHW", "OIHW", "NCHW")) + bias.reshape(1, -1, 1, 1)
    assert conv_out.shape == (N, BASE, H, W)
    assert x_out.shape == x.shape
    assert jnp.allclose(conv_out, ref, atol=1e-5, rtol=1e-5)
    assert jnp.array_equal(x_out, x)

    print("KERNEL_OK")
</pallas_src>

<mosaic_0001>
module attributes {stable_mosaic.version = 11 : i64} {
  func.func @_conv3x3_kernel(%arg0: i32, %arg1: memref<1x4x256xf32, #tpu.memory_space<vmem>>, %arg2: memref<4x72xf32, #tpu.memory_space<vmem>>, %arg3: memref<4x1xf32, #tpu.memory_space<vmem>>, %arg4: memref<1x4x256xf32, #tpu.memory_space<vmem>>, %arg5: memref<72x256xf32, #tpu.memory_space<vmem>>) attributes {dimension_semantics = [#tpu.dimension_semantics<parallel>], iteration_bounds = array<i64: 2>, scalar_prefetch = 0 : i64, scratch_operands = 1 : i64, tpu.core_type = #tpu.core_type<tc>, window_params = [{transform_indices = @transform_0, window_bounds = array<i64: 1, 4, 256>}, {pipeline_mode = #tpu.pipeline_mode<synchronous>, transform_indices = @transform_1, window_bounds = array<i64: 4, 72>}, {pipeline_mode = #tpu.pipeline_mode<synchronous>, transform_indices = @transform_2, window_bounds = array<i64: 4, 1>}, {transform_indices = @transform_3, window_bounds = array<i64: 1, 4, 256>}]} {
    %c0 = arith.constant 0 : index
    %c0_0 = arith.constant 0 : index
    %c0_1 = arith.constant 0 : index
    %0 = vector.load %arg1[%c0, %c0_0, %c0_1] : memref<1x4x256xf32, #tpu.memory_space<vmem>>, vector<1x4x256xf32>
    %1 = vector.shape_cast %0 : vector<1x4x256xf32> to vector<4x256xf32>
    %cst = arith.constant 0.000000e+00 : f32
    %2 = vector.broadcast %cst : f32 to vector<72x256xf32>
    %c0_2 = arith.constant 0 : index
    %c0_3 = arith.constant 0 : index
    %3 = vector.load %arg5[%c0_2, %c0_3] : memref<72x256xf32, #tpu.memory_space<vmem>>, vector<72x256xf32>
    tpu.vector_store %arg5[%c0_2, %c0_3], %2 {strides = array<i32>} : memref<72x256xf32, #tpu.memory_space<vmem>>, vector<72x256xf32>,
    %4 = tpu.iota {dimensions = array<i32: 1>} : vector<4x256xi32>
    %c15_i32 = arith.constant 15 : i32
    %5 = vector.broadcast %c15_i32 : i32 to vector<4x256xi32>
    %6 = arith.andi %4, %5 : vector<4x256xi32>
    %c16_i32 = arith.constant 16 : i32
    %7 = vector.broadcast %c16_i32 : i32 to vector<4x256xi32>
    %8 = arith.cmpi sge, %4, %7 : vector<4x256xi32>
    %c240_i32 = arith.constant 240 : i32
    %9 = vector.broadcast %c240_i32 : i32 to vector<4x256xi32>
    %10 = arith.cmpi slt, %4, %9 : vector<4x256xi32>
    %c1_i32 = arith.constant 1 : i32
    %11 = vector.broadcast %c1_i32 : i32 to vector<4x256xi32>
    %12 = arith.cmpi sge, %6, %11 : vector<4x256xi32>
    %c14_i32 = arith.constant 14 : i32
    %13 = vector.broadcast %c14_i32 : i32 to vector<4x256xi32>
    %14 = arith.cmpi sle, %6, %13 : vector<4x256xi32>
    %c17_i32 = arith.constant 17 : i32
    %15 = tpu.dynamic_rotate %1 by %c17_i32 dim 1 : vector<4x256xf32>, i32 -> vector<4x256xf32>
    %16 = arith.andi %8, %12 : vector<4x256xi1>
    %cst_4 = arith.constant 0.000000e+00 : f32
    %17 = vector.broadcast %cst_4 : f32 to vector<4x256xf32>
    %18 = arith.select %16, %15, %17 : vector<4x256xi1>, vector<4x256xf32>
    %c0_5 = arith.constant 0 : index
    %c0_6 = arith.constant 0 : index
    %19 = vector.load %arg5[%c0_5, %c0_6] : memref<72x256xf32, #tpu.memory_space<vmem>>, vector<4x256xf32>
    tpu.vector_store %arg5[%c0_5, %c0_6], %18 {strides = array<i32>} : memref<72x256xf32, #tpu.memory_space<vmem>>, vector<4x256xf32>,
    %c16_i32_7 = arith.constant 16 : i32
    %20 = tpu.dynamic_rotate %1 by %c16_i32_7 dim 1 : vector<4x256xf32>, i32 -> vector<4x256xf32>
    %cst_8 = arith.constant 0.000000e+00 : f32
    %21 = vector.broadcast %cst_8 : f32 to vector<4x256xf32>
    %22 = arith.select %8, %20, %21 : vector<4x256xi1>, vector<4x256xf32>
    %c8 = arith.constant 8 : index
    %c0_9 = arith.constant 0 : index
    %23 = vector.load %arg5[%c8, %c0_9] : memref<72x256xf32, #tpu.memory_space<vmem>>, vector<4x256xf32>
    tpu.vector_store %arg5[%c8, %c0_9], %22 {strides = array<i32>} : memref<72x256xf32, #tpu.memory_space<vmem>>, vector<4x256xf32>,
    %c15_i32_10 = arith.constant 15 : i32
    %24 = tpu.dynamic_rotate %1 by %c15_i32_10 dim 1 : vector<4x256xf32>, i32 -> vector<4x256xf32>
    %25 = arith.andi %8, %14 : vector<4x256xi1>
    %cst_11 = arith.constant 0.000000e+00 : f32
    %26 = vector.broadcast %cst_11 : f32 to vector<4x256xf32>
    %27 = arith.select %25, %24, %26 : vector<4x256xi1>, vector<4x256xf32>
    %c16 = arith.constant 16 : index
    %c0_12 = arith.constant 0 : index
    %28 = vector.load %arg5[%c16, %c0_12] : memref<72x256xf32, #tpu.memory_space<vmem>>, vector<4x256xf32>
    tpu.vector_store %arg5[%c16, %c0_12], %27 {strides = array<i32>} : memref<72x256xf32, #tpu.memory_space<vmem>>, vector<4x256xf32>,
    %c1_i32_13 = arith.constant 1 : i32
    %29 = tpu.dynamic_rotate %1 by %c1_i32_13 dim 1 : vector<4x256xf32>, i32 -> vector<4x256xf32>
    %cst_14 = arith.constant 0.000000e+00 : f32
    %30 = vector.broadcast %cst_14 : f32 to vector<4x256xf32>
    %31 = arith.select %12, %29, %30 : vector<4x256xi1>, vector<4x256xf32>
    %c24 = arith.constant 24 : index
    %c0_15 = arith.constant 0 : index
    %32 = vector.load %arg5[%c24, %c0_15] : memref<72x256xf32, #tpu.memory_space<vmem>>, vector<4x256xf32>
    tpu.vector_store %arg5[%c24, %c0_15], %31 {strides = array<i32>} : memref<72x256xf32, #tpu.memory_space<vmem>>, vector<4x256xf32>,
    %c32 = arith.constant 32 : index
    %c0_16 = arith.constant 0 : index
    %33 = vector.load %arg5[%c32, %c0_16] : memref<72x256xf32, #tpu.memory_space<vmem>>, vector<4x256xf32>
    tpu.vector_store %arg5[%c32, %c0_16], %1 {strides = array<i32>} : memref<72x256xf32, #tpu.memory_space<vmem>>, vector<4x256xf32>,
    %c255_i32 = arith.constant 255 : i32
    %34 = tpu.dynamic_rotate %1 by %c255_i32 dim 1 : vector<4x256xf32>, i32 -> vector<4x256xf32>
    %cst_17 = arith.constant 0.000000e+00 : f32
    %35 = vector.broadcast %cst_17 : f32 to vector<4x256xf32>
    %36 = arith.select %14, %34, %35 : vector<4x256xi1>, vector<4x256xf32>
    %c40 = arith.constant 40 : index
    %c0_18 = arith.constant 0 : index
    %37 = vector.load %arg5[%c40, %c0_18] : memref<72x256xf32, #tpu.memory_space<vmem>>, vector<4x256xf32>
    tpu.vector_store %arg5[%c40, %c0_18], %36 {strides = array<i32>} : memref<72x256xf32, #tpu.memory_space<vmem>>, vector<4x256xf32>,
    %c241_i32 = arith.constant 241 : i32
    %38 = tpu.dynamic_rotate %1 by %c241_i32 dim 1 : vector<4x256xf32>, i32 -> vector<4x256xf32>
    %39 = arith.andi %10, %12 : vector<4x256xi1>
    %cst_19 = arith.constant 0.000000e+00 : f32
    %40 = vector.broadcast %cst_19 : f32 to vector<4x256xf32>
    %41 = arith.select %39, %38, %40 : vector<4x256xi1>, vector<4x256xf32>
    %c48 = arith.constant 48 : index
    %c0_20 = arith.constant 0 : index
    %42 = vector.load %arg5[%c48, %c0_20] : memref<72x256xf32, #tpu.memory_space<vmem>>, vector<4x256xf32>
    tpu.vector_store %arg5[%c48, %c0_20], %41 {strides = array<i32>} : memref<72x256xf32, #tpu.memory_space<vmem>>, vector<4x256xf32>,
    %c240_i32_21 = arith.constant 240 : i32
    %43 = tpu.dynamic_rotate %1 by %c240_i32_21 dim 1 : vector<4x256xf32>, i32 -> vector<4x256xf32>
    %cst_22 = arith.constant 0.000000e+00 : f32
    %44 = vector.broadcast %cst_22 : f32 to vector<4x256xf32>
    %45 = arith.select %10, %43, %44 : vector<4x256xi1>, vector<4x256xf32>
    %c56 = arith.constant 56 : index
    %c0_23 = arith.constant 0 : index
    %46 = vector.load %arg5[%c56, %c0_23] : memref<72x256xf32, #tpu.memory_space<vmem>>, vector<4x256xf32>
    tpu.vector_store %arg5[%c56, %c0_23], %45 {strides = array<i32>} : memref<72x256xf32, #tpu.memory_space<vmem>>, vector<4x256xf32>,
    %c239_i32 = arith.constant 239 : i32
    %47 = tpu.dynamic_rotate %1 by %c239_i32 dim 1 : vector<4x256xf32>, i32 -> vector<4x256xf32>
    %48 = arith.andi %10, %14 : vector<4x256xi1>
    %cst_24 = arith.constant 0.000000e+00 : f32
    %49 = vector.broadcast %cst_24 : f32 to vector<4x256xf32>
    %50 = arith.select %48, %47, %49 : vector<4x256xi1>, vector<4x256xf32>
    %c64 = arith.constant 64 : index
    %c0_25 = arith.constant 0 : index
    %51 = vector.load %arg5[%c64, %c0_25] : memref<72x256xf32, #tpu.memory_space<vmem>>, vector<4x256xf32>
    tpu.vector_store %arg5[%c64, %c0_25], %50 {strides = array<i32>} : memref<72x256xf32, #tpu.memory_space<vmem>>, vector<4x256xf32>,
    %c0_26 = arith.constant 0 : index
    %c0_27 = arith.constant 0 : index
    %52 = vector.load %arg2[%c0_26, %c0_27] : memref<4x72xf32, #tpu.memory_space<vmem>>, vector<4x72xf32>
    %c0_28 = arith.constant 0 : index
    %c0_29 = arith.constant 0 : index
    %53 = vector.load %arg5[%c0_28, %c0_29] : memref<72x256xf32, #tpu.memory_space<vmem>>, vector<72x256xf32>
    %cst_30 = arith.constant dense<0.000000e+00> : vector<4x256xf32>
    %54 = tpu.matmul %52, %53, %cst_30 {dimension_numbers = #tpu.dot_dimension_numbers<[1], [0], [0], [1], [0, 0, 1, 1], [], []>} : vector<4x72xf32>, vector<72x256xf32>, vector<4x256xf32> -> vector<4x256xf32>
    %c0_31 = arith.constant 0 : index
    %c0_32 = arith.constant 0 : index
    %55 = vector.load %arg3[%c0_31, %c0_32] : memref<4x1xf32, #tpu.memory_space<vmem>>, vector<4x1xf32>
    %56 = vector.broadcast %55 : vector<4x1xf32> to vector<4x256xf32>
    %57 = arith.addf %54, %56 : vector<4x256xf32>
    %c0_33 = arith.constant 0 : index
    %c0_34 = arith.constant 0 : index
    %c0_35 = arith.constant 0 : index
    %58 = vector.load %arg4[%c0_33, %c0_34, %c0_35] : memref<1x4x256xf32, #tpu.memory_space<vmem>>, vector<1x4x256xf32>
    %59 = vector.shape_cast %58 : vector<1x4x256xf32> to vector<4x256xf32>
    %60 = vector.shape_cast %57 : vector<4x256xf32> to vector<1x4x256xf32>
    tpu.vector_store %arg4[%c0_33, %c0_34, %c0_35], %60 {strides = array<i32>} : memref<1x4x256xf32, #tpu.memory_space<vmem>>, vector<1x4x256xf32>,
    return
  }
  func.func @transform_0(%arg0: i32) -> (i32, i32, i32) {
    %c0_i32 = arith.constant 0 : i32
    %c0_i32_0 = arith.constant 0 : i32
    %c0_i32_1 = arith.constant 0 : i32
    return %arg0, %c0_i32, %c0_i32_0 : i32, i32, i32
  }
  func.func @transform_1(%arg0: i32) -> (i32, i32) {
    %c0_i32 = arith.constant 0 : i32
    %c0_i32_0 = arith.constant 0 : i32
    %c0_i32_1 = arith.constant 0 : i32
    return %c0_i32, %c0_i32_0 : i32, i32
  }
  func.func @transform_2(%arg0: i32) -> (i32, i32) {
    %c0_i32 = arith.constant 0 : i32
    %c0_i32_0 = arith.constant 0 : i32
    %c0_i32_1 = arith.constant 0 : i32
    return %c0_i32, %c0_i32_0 : i32, i32
  }
  func.func @transform_3(%arg0: i32) -> (i32, i32, i32) {
    %c0_i32 = arith.constant 0 : i32
    %c0_i32_0 = arith.constant 0 : i32
    %c0_i32_1 = arith.constant 0 : i32
    return %arg0, %c0_i32, %c0_i32_0 : i32, i32, i32
  }
}

</mosaic_0001>

<llo_original>
// kernel: grad_block_forward.1
$region0: #{grad_block_forward.1}
  #allocation0 [shape = 'u32[]', space=smem, size = 0x4, offset = 0x4, fixed_abs, tag = 'smem constant byte address 0x4 - core index']
  #allocation1 [shape = 'u32[144,128]{1,0:T(1,128)}', space=vmem, size = 0x12000, scoped, tag = 'internal scratch']
  #allocation2 [shape = 'f32[72,256]{1,0:T(8,128)}', space=vmem, size = 0x12000, scoped, tag = 'scratch operand']
  %s0 = inlined_call_operand.vmem [shape: f32[2,4,256], index: 0, kind: input, shape index: {}]
  %s1 = inlined_call_operand.vmem [shape: f32[4,72], index: 1, kind: input, shape index: {}]
  %s2 = inlined_call_operand.vmem [shape: f32[4,1], index: 2, kind: input, shape index: {}]
  %s3 = inlined_call_operand.vmem [shape: f32[2,4,256], index: 3, kind: output, shape index: {}]
  %s4 = sld [smem:[#allocation0]]
  $region45: #{grad_block_forward.1} parent=0
    _
  %s6 = ssub.s32 1, %s4
  %s7 = scalar_select 0, %s6, %s4
  loop: start=0, step=1, limit=4
  $region2: #{grad_block_forward.1} parent=0 // loop_pre_header
    _
  $region3: #{grad_block_forward.1} parent=0 // loop_header
    %s9 = sphi 0, %s13
    %p10 = scmp.ge.s32.totalorder %s9, 4
    %s19 = sphi 0, %s21
    %s22 = sphi 0, %s19
    %s23 = sphi 0, %s22
    %s39 = sphi 0, %s23
    %s43 = sphi 0, %s43
    %s45 = sphi 0, %s43
    %s46 = sphi 0, %s45
    %s60 = sphi 0, %s46
    %s64 = sphi 0, %s64
    %s66 = sphi 0, %s64
    %s67 = sphi 0, %s66
    %s81 = sphi 0, %s67
    %s87 = sphi 0, %s89
    %s90 = sphi 0, %s87
    %s91 = sphi 0, %s90
    %s107 = sphi 0, %s91
  $region4: #{grad_block_forward.1} parent=0 // loop_header_branch
    %12 = sbr.rel (%p10) target = $region8
  $region5: #{grad_block_forward.1} parent=0 // loop_body
    %s14 = ssub.s32 %s9, 1
    %s15 = ssub.s32 %s9, 2
    %s16 = sadd.s32 %s9, 1
    %s17 = ssub.s32 %s9, %s16
    %p18 = scmp.eq.s32.totalorder %s17, 0
    %s20 = sadd.s32 %s19, 1
    %s21 = scalar_select %p18, %s19, %s20
    %p24 = pneg %p18
    %p25 = scmp.eq.s32.totalorder %s9, 1
    %p26 = por %p24, %p25
    %p27 = scmp.ne.s32.totalorder %s19, %s22
    %p28 = scmp.eq.s32.totalorder %s9, 0
    %p29 = por %p27, %p28
    %p30 = scmp.ne.s32.totalorder %s19, %s22
    %p31 = scmp.eq.s32.totalorder %s14, 1
    %p32 = por %p30, %p31
    %p33 = scmp.ne.s32.totalorder %s22, %s23
    %p34 = scmp.eq.s32.totalorder %s14, 0
    %p35 = por %p33, %p34
    %p36 = scmp.ne.s32.totalorder %s22, %s23
    %p37 = scmp.eq.s32.totalorder %s15, 1
    %p38 = por %p36, %p37
    %p40 = scmp.ne.s32.totalorder %s23, %s39
    %p41 = scmp.eq.s32.totalorder %s15, 0
    %p42 = por %p40, %p41
    %s44 = sadd.s32 %s43, 1
    %p47 = scmp.eq.s32.totalorder %s9, 1
    %p48 = scmp.ne.s32.totalorder %s43, %s45
    %p49 = scmp.eq.s32.totalorder %s9, 0
    %p50 = por %p48, %p49
    %p51 = scmp.ne.s32.totalorder %s43, %s45
    %p52 = scmp.eq.s32.totalorder %s14, 1
    %p53 = por %p51, %p52
    %p54 = scmp.ne.s32.totalorder %s45, %s46
    %p55 = scmp.eq.s32.totalorder %s14, 0
    %p56 = por %p54, %p55
    %p57 = scmp.ne.s32.totalorder %s45, %s46
    %p58 = scmp.eq.s32.totalorder %s15, 1
    %p59 = por %p57, %p58
    %p61 = scmp.ne.s32.totalorder %s46, %s60
    %p62 = scmp.eq.s32.totalorder %s15, 0
    %p63 = por %p61, %p62
    %s65 = sadd.s32 %s64, 1
    %p68 = scmp.eq.s32.totalorder %s9, 1
    %p69 = scmp.ne.s32.totalorder %s64, %s66
    %p70 = scmp.eq.s32.totalorder %s9, 0
    %p71 = por %p69, %p70
    %p72 = scmp.ne.s32.totalorder %s64, %s66
    %p73 = scmp.eq.s32.totalorder %s14, 1
    %p74 = por %p72, %p73
    %p75 = scmp.ne.s32.totalorder %s66, %s67
    %p76 = scmp.eq.s32.totalorder %s14, 0
    %p77 = por %p75, %p76
    %p78 = scmp.ne.s32.totalorder %s66, %s67
    %p79 = scmp.eq.s32.totalorder %s15, 1
    %p80 = por %p78, %p79
    %p82 = scmp.ne.s32.totalorder %s67, %s81
    %p83 = scmp.eq.s32.totalorder %s15, 0
    %p84 = por %p82, %p83
    %s85 = ssub.s32 %s9, %s16
    %p86 = scmp.eq.s32.totalorder %s85, 0
    %s88 = sadd.s32 %s87, 1
    %s89 = scalar_select %p86, %s87, %s88
    %p92 = pneg %p86
    %p93 = scmp.eq.s32.totalorder %s9, 1
    %p94 = por %p92, %p93
    %p95 = scmp.ne.s32.totalorder %s87, %s90
    %p96 = scmp.eq.s32.totalorder %s9, 0
    %p97 = por %p95, %p96
    %p98 = scmp.ne.s32.totalorder %s87, %s90
    %p99 = scmp.eq.s32.totalorder %s14, 1
    %p100 = por %p98, %p99
    %p101 = scmp.ne.s32.totalorder %s90, %s91
    %p102 = scmp.eq.s32.totalorder %s14, 0
    %p103 = por %p101, %p102
    %p104 = scmp.ne.s32.totalorder %s90, %s91
    %p105 = scmp.eq.s32.totalorder %s15, 1
    %p106 = por %p104, %p105
    %p108 = scmp.ne.s32.totalorder %s91, %s107
    %p109 = scmp.eq.s32.totalorder %s15, 0
    %p110 = por %p108, %p109
    %p111 = scmp.le.s32.totalorder 1, %s9
    %p112 = scmp.lt.s32.totalorder %s9, 3
    %p113 = pnand %p111, %p112
    %p114 = pneg %p113
    // Predicated region
    $region9: #{grad_block_forward.1} parent=5 // pred_check
      _
    $region10: #{grad_block_forward.1} parent=5 // pred_check_branch
      %116 = sbr.rel (%p113) target = $region12
    $region11: #{grad_block_forward.1} parent=5 // pred_region
      %s117 = ssub.s32 %s9, 1
      // Predicated region
      $region13: #{grad_block_forward.1} parent=11 // pred_check
        %p118 = pneg %p56
      $region14: #{grad_block_forward.1} parent=11 // pred_check_branch
        %120 = sbr.rel (%p118) target = $region16
      $region15: #{grad_block_forward.1} parent=11 // pred_region
        _
      $region16: #{grad_block_forward.1} parent=11 // pred_fallthru
        _
      // Predicated region
      $region17: #{grad_block_forward.1} parent=11 // pred_check
        %p121 = pneg %p77
      $region18: #{grad_block_forward.1} parent=11 // pred_check_branch
        %123 = sbr.rel (%p121) target = $region20
      $region19: #{grad_block_forward.1} parent=11 // pred_region
        _
      $region20: #{grad_block_forward.1} parent=11 // pred_fallthru
        _
    $region12: #{grad_block_forward.1} parent=5 // pred_fallthru
      _
    %p124 = scmp.lt.s32.totalorder %s9, 2
    // Predicated region
    $region21: #{grad_block_forward.1} parent=5 // pred_check
      %p125 = pneg %p124
    $region22: #{grad_block_forward.1} parent=5 // pred_check_branch
      %127 = sbr.rel (%p125) target = $region24
    $region23: #{grad_block_forward.1} parent=5 // pred_region
      // Predicated region
      $region25: #{grad_block_forward.1} parent=23 // pred_check
        %p128 = pneg %p29
      $region26: #{grad_block_forward.1} parent=23 // pred_check_branch
        %130 = sbr.rel (%p128) target = $region28
      $region27: #{grad_block_forward.1} parent=23 // pred_region
        %p131 = scmp.lt.s32.totalorder %s9, 1
        %s132 = scalar_select %p131, %s9, 1
        %s133 = smul.addr %s132, 2
        %s134 = smul.addr %s133, 4
        %s135 = scalar_lea.vmem %s0, %s134
      $region28: #{grad_block_forward.1} parent=23 // pred_fallthru
        _
    $region24: #{grad_block_forward.1} parent=5 // pred_fallthru
      _
    %p136 = scmp.le.s32.totalorder 1, %s9
    %p137 = scmp.lt.s32.totalorder %s9, 3
    %p138 = pnand %p136, %p137
    %p139 = pneg %p138
    // Predicated region
    $region29: #{grad_block_forward.1} parent=5 // pred_check
      _
    $region30: #{grad_block_forward.1} parent=5 // pred_check_branch
      %141 = sbr.rel (%p138) target = $region32
    $region31: #{grad_block_forward.1} parent=5 // pred_region
      %s142 = ssub.s32 %s9, 1
      %p143 = scmp.lt.s32.totalorder %s14, 1
      %s144 = scalar_select %p143, %s14, 1
      %s145 = smul.addr %s144, 2
      %s146 = smul.addr %s145, 4
      %s147 = scalar_lea.vmem %s0, %s146
      %p148 = pneg %p35
      %p149 = pneg %p32
      %p150 = pneg %p56
      %p151 = pneg %p53
      %p152 = pneg %p77
      %p153 = pneg %p74
      %p154 = pneg %p103
      %p155 = pneg %p100
      %p156 = scmp.lt.s32.totalorder %s14, 1
      %s157 = scalar_select %p156, %s14, 1
      %s158 = smul.addr %s157, 2
      %s159 = smul.addr %s158, 4
      %s160 = scalar_lea.vmem %s3, %s159
      %p161 = scmp.lt.s32.totalorder %s14, 1
      %s162 = scalar_select %p161, %s14, 1
      %s163 = smul.addr %s162, 2
      %s164 = smul.addr %s163, 4
      %s165 = scalar_lea.vmem %s0, %s164
      %p166 = scmp.lt.s32.totalorder %s14, 1
      %s167 = scalar_select %p166, %s14, 1
      %s168 = smul.addr %s167, 2
      %s169 = smul.addr %s168, 4
      %s170 = scalar_lea.vmem %s3, %s169
      %v171 = vld [vmem:[%s165] sm:$0xff]
      %172 = vst [vmem:[#allocation2] sm:$0xff] 0.0
      %173 = vst [vmem:[#allocation2 + $0x8] sm:$0xff] 0.0
      %174 = vst [vmem:[#allocation2 + $0x10] sm:$0xff] 0.0
      %175 = vst [vmem:[#allocation2 + $0x18] sm:$0xff] 0.0
      %176 = vst [vmem:[#allocation2 + $0x20] sm:$0xff] 0.0
      %177 = vst [vmem:[#allocation2 + $0x28] sm:$0xff] 0.0
      %178 = vst [vmem:[#allocation2 + $0x30] sm:$0xff] 0.0
      %179 = vst [vmem:[#allocation2 + $0x38] sm:$0xff] 0.0
      %180 = vst [vmem:[#allocation2 + $0x40] sm:$0xff] 0.0
      %181 = vst [vmem:[#allocation2 + $0x48] sm:$0xff] 0.0
      %182 = vst [vmem:[#allocation2 + $0x50] sm:$0xff] 0.0
      %183 = vst [vmem:[#allocation2 + $0x58] sm:$0xff] 0.0
      %184 = vst [vmem:[#allocation2 + $0x60] sm:$0xff] 0.0
      %185 = vst [vmem:[#allocation2 + $0x68] sm:$0xff] 0.0
      %186 = vst [vmem:[#allocation2 + $0x70] sm:$0xff] 0.0
      %187 = vst [vmem:[#allocation2 + $0x78] sm:$0xff] 0.0
      %188 = vst [vmem:[#allocation2 + $0x80] sm:$0xff] 0.0
      %189 = vst [vmem:[#allocation2 + $0x88] sm:$0xff] 0.0
      %v190 = vlaneseq
      %v191 = vand.u32 %v190, 127
      %v192 = vadd.s32 %v191, 128
      %v193 = vand.u32 %v191, 15
      %v194 = vand.u32 %v192, 15
      %vm195 = vcmp.ge.s32.totalorder %v191, 16
      %vm196 = vcmp.ge.s32.totalorder %v192, 16
      %vm197 = vcmp.lt.s32.totalorder %v191, 240
      %vm198 = vcmp.lt.s32.totalorder %v192, 240
      %vm199 = vcmp.ge.s32.totalorder %v193, 1
      %vm200 = vcmp.ge.s32.totalorder %v194, 1
      %vm201 = vcmp.le.s32.totalorder %v193, 14
      %vm202 = vcmp.le.s32.totalorder %v194, 14
      %v204 = vcombine.high %v171, %v171
      %206 = vrot.lane.b32.xlu0 %v171, 17
      %v207 = vpop.permute.xlu0 %206
      %208 = vrot.lane.b32.xlu0 %v204, 17
      %v209 = vpop.permute.xlu0 %208
      %vm210 = vcmp.lt.s32.totalorder %v191, 17
      %v211 = vsel %vm210, %v207, %v209
      %v212 = vsel %vm210, %v209, %v207
      %vm213 = vmand %vm195, %vm199
      %vm214 = vmand %vm196, %vm200
      %v215 = vsel %vm213, %v212, 0.0
      %v216 = vsel %vm214, %v211, 0.0
      %217 = vst [vmem:[#allocation2] sm:$0xf] %v215
      %218 = vst [vmem:[#allocation2 + $0x8] sm:$0xf] %v216
      %219 = vrot.lane.b32.xlu0 %v171, 16
      %v220 = vpop.permute.xlu0 %219
      %221 = vrot.lane.b32.xlu0 %v204, 16
      %v222 = vpop.permute.xlu0 %221
      %vm223 = vcmp.lt.s32.totalorder %v191, 16
      %v224 = vsel %vm223, %v220, %v222
      %v225 = vsel %vm223, %v222, %v220
      %v226 = vsel %vm195, %v225, 0.0
      %v227 = vsel %vm196, %v224, 0.0
      %228 = vst [vmem:[#allocation2 + $0x10] sm:$0xf] %v226
      %229 = vst [vmem:[#allocation2 + $0x18] sm:$0xf] %v227
      %230 = vrot.lane.b32.xlu0 %v171, 15
      %v231 = vpop.permute.xlu0 %230
      %232 = vrot.lane.b32.xlu0 %v204, 15
      %v233 = vpop.permute.xlu0 %232
      %vm234 = vcmp.lt.s32.totalorder %v191, 15
      %v235 = vsel %vm234, %v231, %v233
      %v236 = vsel %vm234, %v233, %v231
      %vm237 = vmand %vm195, %vm201
      %vm238 = vmand %vm196, %vm202
      %v239 = vsel %vm237, %v236, 0.0
      %v240 = vsel %vm238, %v235, 0.0
      %241 = vst [vmem:[#allocation2 + $0x20] sm:$0xf] %v239
      %242 = vst [vmem:[#allocation2 + $0x28] sm:$0xf] %v240
      %243 = vrot.lane.b32.xlu0 %v171, 1
      %v244 = vpop.permute.xlu0 %243
      %245 = vrot.lane.b32.xlu0 %v204, 1
      %v246 = vpop.permute.xlu0 %245
      %vm247 = vcmp.lt.s32.totalorder %v191, 1
      %v248 = vsel %vm247, %v244, %v246
      %v249 = vsel %vm247, %v246, %v244
      %v250 = vsel %vm199, %v249, 0.0
      %v251 = vsel %vm200, %v248, 0.0
      %252 = vst [vmem:[#allocation2 + $0x30] sm:$0xf] %v250
      %253 = vst [vmem:[#allocation2 + $0x38] sm:$0xf] %v251
      %254 = vst [vmem:[#allocation2 + $0x40] sm:$0xf] %v171
      %255 = vst [vmem:[#allocation2 + $0x48] sm:$0xf] %v204
      %256 = vrot.lane.b32.xlu0 %v171, 127
      %v257 = vpop.permute.xlu0 %256
      %258 = vrot.lane.b32.xlu0 %v204, 127
      %v259 = vpop.permute.xlu0 %258
      %vm260 = vcmp.lt.s32.totalorder %v191, 127
      %v261 = vsel %vm260, %v257, %v259
      %v262 = vsel %vm260, %v259, %v257
      %v263 = vsel %vm201, %v261, 0.0
      %v264 = vsel %vm202, %v262, 0.0
      %265 = vst [vmem:[#allocation2 + $0x50] sm:$0xf] %v263
      %266 = vst [vmem:[#allocation2 + $0x58] sm:$0xf] %v264
      %267 = vrot.lane.b32.xlu0 %v171, 113
      %v268 = vpop.permute.xlu0 %267
      %269 = vrot.lane.b32.xlu0 %v204, 113
      %v270 = vpop.permute.xlu0 %269
      %vm271 = vcmp.lt.s32.totalorder %v191, 113
      %v272 = vsel %vm271, %v268, %v270
      %v273 = vsel %vm271, %v270, %v268
      %vm274 = vmand %vm197, %vm199
      %vm275 = vmand %vm198, %vm200
      %v276 = vsel %vm274, %v272, 0.0
      %v277 = vsel %vm275, %v273, 0.0
      %278 = vst [vmem:[#allocation2 + $0x60] sm:$0xf] %v276
      %279 = vst [vmem:[#allocation2 + $0x68] sm:$0xf] %v277
      %280 = vrot.lane.b32.xlu0 %v171, 112
      %v281 = vpop.permute.xlu0 %280
      %282 = vrot.lane.b32.xlu0 %v204, 112
      %v283 = vpop.permute.xlu0 %282
      %vm284 = vcmp.lt.s32.totalorder %v191, 112
      %v285 = vsel %vm284, %v281, %v283
      %v286 = vsel %vm284, %v283, %v281
      %v287 = vsel %vm197, %v285, 0.0
      %v288 = vsel %vm198, %v286, 0.0
      %289 = vst [vmem:[#allocation2 + $0x70] sm:$0xf] %v287
      %290 = vst [vmem:[#allocation2 + $0x78] sm:$0xf] %v288
      %291 = vrot.lane.b32.xlu0 %v171, 111
      %v292 = vpop.permute.xlu0 %291
      %293 = vrot.lane.b32.xlu0 %v204, 111
      %v294 = vpop.permute.xlu0 %293
      %vm295 = vcmp.lt.s32.totalorder %v191, 111
      %v296 = vsel %vm295, %v292, %v294
      %v297 = vsel %vm295, %v294, %v292
      %vm298 = vmand %vm197, %vm201
      %vm299 = vmand %vm198, %vm202
      %v300 = vsel %vm298, %v296, 0.0
      %v301 = vsel %vm299, %v297, 0.0
      %302 = vst [vmem:[#allocation2 + $0x80] sm:$0xf] %v300
      %303 = vst [vmem:[#allocation2 + $0x88] sm:$0xf] %v301
      %v304 = vld [vmem:[%s1] sm:$0xf]
      %v305 = vld [vmem:[#allocation2] sm:$0xff]
      %v306 = vld [vmem:[#allocation2 + $0x8] sm:$0xff]
      %v307 = vld [vmem:[#allocation2 + $0x10] sm:$0xff]
      %v308 = vld [vmem:[#allocation2 + $0x18] sm:$0xff]
      %v309 = vld [vmem:[#allocation2 + $0x20] sm:$0xff]
      %v310 = vld [vmem:[#allocation2 + $0x28] sm:$0xff]
      %v311 = vld [vmem:[#allocation2 + $0x30] sm:$0xff]
      %v312 = vld [vmem:[#allocation2 + $0x38] sm:$0xff]
      %v313 = vld [vmem:[#allocation2 + $0x40] sm:$0xff]
      %v314 = vld [vmem:[#allocation2 + $0x48] sm:$0xff]
      %v315 = vld [vmem:[#allocation2 + $0x50] sm:$0xff]
      %v316 = vld [vmem:[#allocation2 + $0x58] sm:$0xff]
      %v317 = vld [vmem:[#allocation2 + $0x60] sm:$0xff]
      %v318 = vld [vmem:[#allocation2 + $0x68] sm:$0xff]
      %v319 = vld [vmem:[#allocation2 + $0x70] sm:$0xff]
      %v320 = vld [vmem:[#allocation2 + $0x78] sm:$0xff]
      %v321 = vld [vmem:[#allocation2 + $0x80] sm:$0xff]
      %v322 = vld [vmem:[#allocation2 + $0x88] sm:$0xff]
      %v323 = vld [vmem:[%s2] sm:$0xf]
      %325 = vset.pattern.permute.xlu0 0
      %326 = vperm.xlu0 %325, %v323
      %v327 = vpop.permute.xlu0 %326
      %vm329 = vcmask 588800
      %v331 = vsel %vm329, %v304, 0
      %333 = vmatprep.subr.mxu0 %v306
      %334 = vmatpush1.msra.mxu0 %v305
      %335 = vmatprep.subr.mxu0 %v308
      %336 = vmatpush1.msra.mxu0 %v307
      %337 = vmatprep.subr.mxu0 %v310
      %338 = vmatpush1.msra.mxu0 %v309
      %339 = vmatprep.subr.mxu0 %v312
      %340 = vmatpush1.msra.mxu0 %v311
      %341 = vmatprep.subr.mxu0 %v314
      %342 = vmatpush1.msra.mxu0 %v313
      %343 = vmatprep.subr.mxu0 %v316
      %344 = vmatpush1.msra.mxu0 %v315
      %345 = vmatprep.subr.mxu0 %v318
      %346 = vmatpush1.msra.mxu0 %v317
      %347 = vmatprep.subr.mxu0 %v320
      %348 = vmatpush1.msra.mxu0 %v319
      %349 = vmatprep.subr.mxu0 %v322
      %350 = vmatpush1.msra.mxu0 %v321
      %351 = vmatprep.subr.mxu0 0.0
      %352 = vmatpush1.msra.mxu0 0.0
      %353 = vmatprep.subr.mxu0 0.0
      %354 = vmatpush1.msra.mxu0 0.0
      %355 = vmatprep.subr.mxu0 0.0
      %356 = vmatpush1.msra.mxu0 0.0
      %357 = vmatprep.subr.mxu0 0.0
      %358 = vmatpush1.msra.mxu0 0.0
      %359 = vmatprep.subr.mxu0 0.0
      %360 = vmatpush1.msra.mxu0 0.0
      %361 = vmatprep.subr.mxu0 0.0
      %362 = vmatpush1.msra.mxu0 0.0
      %363 = vmatprep.subr.mxu0 0.0
      %364 = vmatpush1.msra.mxu0 0.0
      %365 = vmatprep.subr.mxu0 0.0
      %366 = vmatpush1.msra.mxu0 0.0
      %367 = vmatprep.subr.mxu0 0.0
      %368 = vmatpush1.msra.mxu0 0.0
      %369 = vmatprep.subr.mxu0 0.0
      %370 = vmatpush1.msra.mxu0 0.0
      %371 = vmatprep.subr.mxu0 0.0
      %372 = vmatpush1.msra.mxu0 0.0
      %373 = vmatprep.subr.mxu0 0.0
      %374 = vmatpush1.msra.mxu0 0.0
      %375 = vmatprep.subr.mxu0 0.0
      %376 = vmatpush1.msra.mxu0 0.0
      %377 = vmatprep.subr.mxu0 0.0
      %378 = vmatpush1.msra.mxu0 0.0
      %379 = vmatprep.subr.mxu0 0.0
      %380 = vmatpush1.msra.mxu0 0.0
      %381 = vmatprep.subr.mxu0 0.0
      %382 = vmatpush1.msra.mxu0 0.0
      %383 = vmatprep.subr.mxu0 0.0
      %384 = vmatpush1.msra.mxu0 0.0
      %385 = vmatprep.subr.mxu0 0.0
      %386 = vmatpush1.msra.mxu0 0.0
      %387 = vmatprep.subr.mxu0 0.0
      %388 = vmatpush1.msra.mxu0 0.0
      %389 = vmatprep.subr.mxu0 0.0
      %390 = vmatpush1.msra.mxu0 0.0
      %391 = vmatprep.subr.mxu0 0.0
      %392 = vmatpush1.msra.mxu0 0.0
      %393 = vmatprep.subr.mxu0 0.0
      %394 = vmatpush1.msra.mxu0 0.0
      %395 = vmatprep.subr.mxu0 0.0
      %396 = vmatpush1.msra.mxu0 0.0
      %397 = vmatprep.mubr.f32.mxu0 0.0
      %398 = vmatmul.mubr.f32.gmra.mrb[0].mxu0 %v331
      %v399 = vpop.f32.mrb[0].mxu0
      %v400 = vadd.f32 %v327, %v399
      %v401 = vpop.f32.mrb[0].mxu0
      %v402 = vadd.f32 %v327, %v401
      %403 = vdwg.mxu0
      %v406 = vcombine.low %v400, %v402
      %408 = vst [vmem:[%s170] sm:$0xff] %v406
      %p409 = scmp.lt.s32.totalorder %s14, 1
      %s410 = scalar_select %p409, %s14, 1
      %s411 = smul.addr %s410, 2
      %s412 = smul.addr %s411, 4
      %s413 = scalar_lea.vmem %s3, %s412
      // Predicated region
      $region33: #{grad_block_forward.1} parent=31 // pred_check
        %p414 = pneg %p100
      $region34: #{grad_block_forward.1} parent=31 // pred_check_branch
        %416 = sbr.rel (%p414) target = $region36
      $region35: #{grad_block_forward.1} parent=31 // pred_region
        _
      $region36: #{grad_block_forward.1} parent=31 // pred_fallthru
        _
    $region32: #{grad_block_forward.1} parent=5 // pred_fallthru
      _
    %p417 = scmp.le.s32.totalorder 2, %s9
    // Predicated region
    $region37: #{grad_block_forward.1} parent=5 // pred_check
      %p418 = pneg %p417
    $region38: #{grad_block_forward.1} parent=5 // pred_check_branch
      %420 = sbr.rel (%p418) target = $region40
    $region39: #{grad_block_forward.1} parent=5 // pred_region
      %s421 = ssub.s32 %s9, 2
      // Predicated region
      $region41: #{grad_block_forward.1} parent=39 // pred_check
        %p422 = pneg %p106
      $region42: #{grad_block_forward.1} parent=39 // pred_check_branch
        %424 = sbr.rel (%p422) target = $region44
      $region43: #{grad_block_forward.1} parent=39 // pred_region
        %p425 = scmp.lt.s32.totalorder %s15, 1
        %s426 = scalar_select %p425, %s15, 1
        %s427 = smul.addr %s426, 2
        %s428 = smul.addr %s427, 4
        %s429 = scalar_lea.vmem %s3, %s428
      $region44: #{grad_block_forward.1} parent=39 // pred_fallthru
        _
    $region40: #{grad_block_forward.1} parent=5 // pred_fallthru
      _
  $region6: #{grad_block_forward.1} parent=0 // loop_footer
    %s13 = sadd.s32 1, %s9
  $region7: #{grad_block_forward.1} parent=0 // loop_footer_branch
    %8 = sbr.rel target = $region3
  $region8: #{grad_block_forward.1} parent=0 // loop_exit
    _

</llo_original>
